<compile_context>
chip_gen: v7x
topology: tpu7x:2x2x1
jax: 0.10.0
libtpu: 0.0.40
codegen_flags: <defaults>
</compile_context>

<pallas_src>
import jax
import jax.numpy as jnp
from jax.experimental import pallas as pl
from jax.experimental.pallas import tpu as pltpu


def mlp_kernel(x_ref, w1_ref, w2_ref, w3_ref, w4_ref, b_ref, o_ref):
    # x_ref: (tile_b, in_dim) bf16 | w*_ref: zero-padded bf16 | b_ref: (4, d_max) f32
    # o_ref: (tile_b, out_dim) f32  (only the real output columns)
    d1 = w1_ref.shape[1]
    d2 = w2_ref.shape[1]
    d3 = w3_ref.shape[1]
    out_dim = o_ref.shape[1]

    h = jnp.dot(x_ref[...], w1_ref[...],
                preferred_element_type=jnp.float32) + b_ref[0:1, 0:d1]
    h = jnp.maximum(h, 0.0)

    h = jnp.dot(h.astype(jnp.bfloat16), w2_ref[...],
                preferred_element_type=jnp.float32) + b_ref[1:2, 0:d2]
    h = jnp.maximum(h, 0.0)

    h = jnp.dot(h.astype(jnp.bfloat16), w3_ref[...],
                preferred_element_type=jnp.float32) + b_ref[2:3, 0:d3]
    h = jnp.maximum(h, 0.0)

    h = jnp.dot(h.astype(jnp.bfloat16), w4_ref[...],
                preferred_element_type=jnp.float32)
    h = h[:, :out_dim] + b_ref[3:4, 0:out_dim]
    h = jnp.maximum(h, 0.0)   # ReLU on the output layer too (matches the PyTorch module)

    o_ref[...] = h.astype(o_ref.dtype)


def _round_up(n, m):
    return ((n + m - 1) // m) * m


def prepare_params(params):
    """One-time prep: zero-pad weights to 128-lane multiples, cast to bf16 (MXU-native),
    and fuse the four tiny biases into a single (4, 128) f32 buffer (1 DMA instead of 4)."""
    (w1, b1), (w2, b2), (w3, b3), (w4, b4) = params
    LANE = 128
    in_dim = w1.shape[0]
    d1 = _round_up(w1.shape[1], LANE)
    d2 = _round_up(w2.shape[1], LANE)
    d3 = _round_up(w3.shape[1], LANE)
    d4 = _round_up(w4.shape[1], LANE)
    d_max = max(d1, d2, d3, d4)

    def pad_w(w, rows, cols):
        w = jnp.pad(w, ((0, rows - w.shape[0]), (0, cols - w.shape[1])))
        return w.astype(jnp.bfloat16)

    w1p = pad_w(w1, in_dim, d1)
    w2p = pad_w(w2, d1, d2)
    w3p = pad_w(w3, d2, d3)
    w4p = pad_w(w4, d3, d4)

    def pad_b(b, cols):
        b = b.reshape(1, -1).astype(jnp.float32)
        return jnp.pad(b, ((0, 0), (0, cols - b.shape[1])))

    b_all = jnp.concatenate(
        [pad_b(b1, d_max), pad_b(b2, d_max), pad_b(b3, d_max), pad_b(b4, d_max)], axis=0)

    out_dim = int(w4.shape[1])
    return (w1p, w2p, w3p, w4p, b_all, out_dim)


def _choose_tile_b(batch, tile_b_max):
    if batch <= 8:
        return batch                      # full-dim block (legal even if not a multiple of 8)
    # Cap at ~half the batch (rounded to 8 sublanes) so the parallel grid has >= 2 steps
    # (uses both v7x TensorCores), then cap at tile_b_max for VMEM / pipelining.
    half = _round_up(-(-batch // 2), 8)
    return min(tile_b_max, half)


def neural_net_forward(x, prepared, *, tile_b_max=2048):
    w1p, w2p, w3p, w4p, b_all, out_dim = prepared
    batch, in_dim = x.shape

    x = x.astype(jnp.bfloat16)            # bf16 HBM->VMEM DMA (operands are bf16 on the MXU anyway)

    tile_b = _choose_tile_b(batch, tile_b_max)
    grid = (pl.cdiv(batch, tile_b),)      # ragged last block handled by Pallas; no jnp.pad of x

    def const(arr):
        nd = arr.ndim
        return pl.BlockSpec(arr.shape, lambda i, _nd=nd: (0,) * _nd)

    d1, d2, d3, d4 = w1p.shape[1], w2p.shape[1], w3p.shape[1], w4p.shape[1]
    flops = 2 * batch * (in_dim * d1 + d1 * d2 + d2 * d3 + d3 * d4)
    bytes_accessed = (batch * in_dim * 2
                      + sum(int(w.size) * 2 for w in (w1p, w2p, w3p, w4p))
                      + int(b_all.size) * 4
                      + batch * out_dim * 4)

    out = pl.pallas_call(
        mlp_kernel,
        out_shape=jax.ShapeDtypeStruct((batch, out_dim), jnp.float32),
        grid=grid,
        in_specs=[
            pl.BlockSpec((tile_b, in_dim), lambda i: (i, 0)),   # x: tiled on batch
            const(w1p), const(w2p), const(w3p), const(w4p),     # weights: VMEM-resident
            const(b_all),                                       # fused bias buffer
        ],
        out_specs=pl.BlockSpec((tile_b, out_dim), lambda i: (i, 0)),  # only real columns
        compiler_params=pltpu.CompilerParams(
            dimension_semantics=("parallel",),
            vmem_limit_bytes=32 << 20,
        ),
        cost_estimate=pl.CostEstimate(
            flops=flops, transcendentals=0, bytes_accessed=bytes_accessed),
    )(x, w1p, w2p, w3p, w4p, b_all)

    return out


def init_params(key, input_dim, hidden_dim, output_dim):
    # Deterministic synthetic init (uniform, like torch Linear's default range).
    dims = [(input_dim, hidden_dim), (hidden_dim, 100), (100, 50), (50, output_dim)]
    params = []
    for i, (fan_in, fan_out) in enumerate(dims):
        kw, kb = jax.random.split(jax.random.fold_in(key, i))
        bound = 1.0 / (fan_in ** 0.5)
        w = jax.random.uniform(kw, (fan_in, fan_out), jnp.float32, -bound, bound)
        b = jax.random.uniform(kb, (1, fan_out), jnp.float32, -bound, bound)
        params.append((w, b))
    return params


def reference_forward(x, params):
    # Mirrors the kernel's numerics: bf16 operands on the MXU, f32 accumulation.
    h = x
    for w, b in params:
        h = jnp.dot(h.astype(jnp.bfloat16), w.astype(jnp.bfloat16),
                    preferred_element_type=jnp.float32) + b.reshape(1, -1)
        h = jnp.maximum(h, 0.0)
    return h


if __name__ == "__main__":
    key = jax.random.PRNGKey(0)
    batch, input_dim, hidden_dim, output_dim = 8, 32, 64, 10

    kx, kp = jax.random.split(key)
    x = jax.random.normal(kx, (batch, input_dim), jnp.float32)
    params = init_params(kp, input_dim, hidden_dim, output_dim)

    prepared = prepare_params(params)            # one-time weight/bias pad + bf16 cast
    out = neural_net_forward(x, prepared)
    out = jax.block_until_ready(out)

    ref = reference_forward(x, params)
    assert out.shape == (batch, output_dim)
    assert jnp.allclose(out, ref, atol=1e-2, rtol=1e-2), "mismatch vs reference"

    print("KERNEL_OK")
</pallas_src>

<mosaic_0001>
module attributes {stable_mosaic.version = 11 : i64} {
  func.func @mlp_kernel(%arg0: i32, %arg1: memref<8x32xbf16, #tpu.memory_space<vmem>>, %arg2: memref<32x128xbf16, #tpu.memory_space<vmem>>, %arg3: memref<128x128xbf16, #tpu.memory_space<vmem>>, %arg4: memref<128x128xbf16, #tpu.memory_space<vmem>>, %arg5: memref<128x128xbf16, #tpu.memory_space<vmem>>, %arg6: memref<4x128xf32, #tpu.memory_space<vmem>>, %arg7: memref<8x10xf32, #tpu.memory_space<vmem>>) attributes {dimension_semantics = [#tpu.dimension_semantics<parallel>], iteration_bounds = array<i64: 1>, scalar_prefetch = 0 : i64, scratch_operands = 0 : i64, tpu.core_type = #tpu.core_type<tc>, window_params = [{transform_indices = @transform_0, window_bounds = array<i64: 8, 32>}, {pipeline_mode = #tpu.pipeline_mode<synchronous>, transform_indices = @transform_1, window_bounds = array<i64: 32, 128>}, {pipeline_mode = #tpu.pipeline_mode<synchronous>, transform_indices = @transform_2, window_bounds = array<i64: 128, 128>}, {pipeline_mode = #tpu.pipeline_mode<synchronous>, transform_indices = @transform_3, window_bounds = array<i64: 128, 128>}, {pipeline_mode = #tpu.pipeline_mode<synchronous>, transform_indices = @transform_4, window_bounds = array<i64: 128, 128>}, {pipeline_mode = #tpu.pipeline_mode<synchronous>, transform_indices = @transform_5, window_bounds = array<i64: 4, 128>}, {transform_indices = @transform_6, window_bounds = array<i64: 8, 10>}]} {
    %c0 = arith.constant 0 : index
    %c0_0 = arith.constant 0 : index
    %0 = vector.load %arg1[%c0, %c0_0] : memref<8x32xbf16, #tpu.memory_space<vmem>>, vector<8x32xbf16>
    %c0_1 = arith.constant 0 : index
    %c0_2 = arith.constant 0 : index
    %1 = vector.load %arg2[%c0_1, %c0_2] : memref<32x128xbf16, #tpu.memory_space<vmem>>, vector<32x128xbf16>
    %cst = arith.constant dense<0.000000e+00> : vector<8x128xf32>
    %2 = tpu.matmul %0, %1, %cst {dimension_numbers = #tpu.dot_dimension_numbers<[1], [0], [0], [1], [0, 0, 1, 1], [], []>} : vector<8x32xbf16>, vector<32x128xbf16>, vector<8x128xf32> -> vector<8x128xf32>
    %c0_3 = arith.constant 0 : index
    %c0_4 = arith.constant 0 : index
    %3 = vector.load %arg6[%c0_3, %c0_4] : memref<4x128xf32, #tpu.memory_space<vmem>>, vector<1x128xf32>
    %4 = vector.broadcast %3 : vector<1x128xf32> to vector<8x128xf32>
    %5 = arith.addf %2, %4 : vector<8x128xf32>
    %cst_5 = arith.constant 0.000000e+00 : f32
    %6 = vector.broadcast %cst_5 : f32 to vector<8x128xf32>
    %7 = arith.maximumf %5, %6 : vector<8x128xf32>
    %8 = arith.truncf %7 : vector<8x128xf32> to vector<8x128xbf16>
    %c0_6 = arith.constant 0 : index
    %c0_7 = arith.constant 0 : index
    %9 = vector.load %arg3[%c0_6, %c0_7] : memref<128x128xbf16, #tpu.memory_space<vmem>>, vector<128x128xbf16>
    %cst_8 = arith.constant dense<0.000000e+00> : vector<8x128xf32>
    %10 = tpu.matmul %8, %9, %cst_8 {dimension_numbers = #tpu.dot_dimension_numbers<[1], [0], [0], [1], [0, 0, 1, 1], [], []>} : vector<8x128xbf16>, vector<128x128xbf16>, vector<8x128xf32> -> vector<8x128xf32>
    %c1 = arith.constant 1 : index
    %c0_9 = arith.constant 0 : index
    %11 = vector.load %arg6[%c1, %c0_9] : memref<4x128xf32, #tpu.memory_space<vmem>>, vector<1x128xf32>
    %12 = vector.broadcast %11 : vector<1x128xf32> to vector<8x128xf32>
    %13 = arith.addf %10, %12 : vector<8x128xf32>
    %cst_10 = arith.constant 0.000000e+00 : f32
    %14 = vector.broadcast %cst_10 : f32 to vector<8x128xf32>
    %15 = arith.maximumf %13, %14 : vector<8x128xf32>
    %16 = arith.truncf %15 : vector<8x128xf32> to vector<8x128xbf16>
    %c0_11 = arith.constant 0 : index
    %c0_12 = arith.constant 0 : index
    %17 = vector.load %arg4[%c0_11, %c0_12] : memref<128x128xbf16, #tpu.memory_space<vmem>>, vector<128x128xbf16>
    %cst_13 = arith.constant dense<0.000000e+00> : vector<8x128xf32>
    %18 = tpu.matmul %16, %17, %cst_13 {dimension_numbers = #tpu.dot_dimension_numbers<[1], [0], [0], [1], [0, 0, 1, 1], [], []>} : vector<8x128xbf16>, vector<128x128xbf16>, vector<8x128xf32> -> vector<8x128xf32>
    %c2 = arith.constant 2 : index
    %c0_14 = arith.constant 0 : index
    %19 = vector.load %arg6[%c2, %c0_14] : memref<4x128xf32, #tpu.memory_space<vmem>>, vector<1x128xf32>
    %20 = vector.broadcast %19 : vector<1x128xf32> to vector<8x128xf32>
    %21 = arith.addf %18, %20 : vector<8x128xf32>
    %cst_15 = arith.constant 0.000000e+00 : f32
    %22 = vector.broadcast %cst_15 : f32 to vector<8x128xf32>
    %23 = arith.maximumf %21, %22 : vector<8x128xf32>
    %24 = arith.truncf %23 : vector<8x128xf32> to vector<8x128xbf16>
    %c0_16 = arith.constant 0 : index
    %c0_17 = arith.constant 0 : index
    %25 = vector.load %arg5[%c0_16, %c0_17] : memref<128x128xbf16, #tpu.memory_space<vmem>>, vector<128x128xbf16>
    %cst_18 = arith.constant dense<0.000000e+00> : vector<8x128xf32>
    %26 = tpu.matmul %24, %25, %cst_18 {dimension_numbers = #tpu.dot_dimension_numbers<[1], [0], [0], [1], [0, 0, 1, 1], [], []>} : vector<8x128xbf16>, vector<128x128xbf16>, vector<8x128xf32> -> vector<8x128xf32>
    %27 = vector.extract_strided_slice %26 {offsets = [0, 0], sizes = [8, 10], strides = [1, 1]} : vector<8x128xf32> to vector<8x10xf32>
    %c3 = arith.constant 3 : index
    %c0_19 = arith.constant 0 : index
    %28 = vector.load %arg6[%c3, %c0_19] : memref<4x128xf32, #tpu.memory_space<vmem>>, vector<1x10xf32>
    %29 = vector.broadcast %28 : vector<1x10xf32> to vector<8x10xf32>
    %30 = arith.addf %27, %29 : vector<8x10xf32>
    %cst_20 = arith.constant 0.000000e+00 : f32
    %31 = vector.broadcast %cst_20 : f32 to vector<8x10xf32>
    %32 = arith.maximumf %30, %31 : vector<8x10xf32>
    %c0_21 = arith.constant 0 : index
    %c0_22 = arith.constant 0 : index
    %33 = vector.load %arg7[%c0_21, %c0_22] : memref<8x10xf32, #tpu.memory_space<vmem>>, vector<8x10xf32>
    tpu.vector_store %arg7[%c0_21, %c0_22], %32 {strides = array<i32>} : memref<8x10xf32, #tpu.memory_space<vmem>>, vector<8x10xf32>,
    return
  }
  func.func @transform_0(%arg0: i32) -> (i32, i32) {
    %c0_i32 = arith.constant 0 : i32
    %c0_i32_0 = arith.constant 0 : i32
    return %arg0, %c0_i32 : i32, i32
  }
  func.func @transform_1(%arg0: i32) -> (i32, i32) {
    %c0_i32 = arith.constant 0 : i32
    %c0_i32_0 = arith.constant 0 : i32
    %c0_i32_1 = arith.constant 0 : i32
    return %c0_i32, %c0_i32_0 : i32, i32
  }
  func.func @transform_2(%arg0: i32) -> (i32, i32) {
    %c0_i32 = arith.constant 0 : i32
    %c0_i32_0 = arith.constant 0 : i32
    %c0_i32_1 = arith.constant 0 : i32
    return %c0_i32, %c0_i32_0 : i32, i32
  }
  func.func @transform_3(%arg0: i32) -> (i32, i32) {
    %c0_i32 = arith.constant 0 : i32
    %c0_i32_0 = arith.constant 0 : i32
    %c0_i32_1 = arith.constant 0 : i32
    return %c0_i32, %c0_i32_0 : i32, i32
  }
  func.func @transform_4(%arg0: i32) -> (i32, i32) {
    %c0_i32 = arith.constant 0 : i32
    %c0_i32_0 = arith.constant 0 : i32
    %c0_i32_1 = arith.constant 0 : i32
    return %c0_i32, %c0_i32_0 : i32, i32
  }
  func.func @transform_5(%arg0: i32) -> (i32, i32) {
    %c0_i32 = arith.constant 0 : i32
    %c0_i32_0 = arith.constant 0 : i32
    %c0_i32_1 = arith.constant 0 : i32
    return %c0_i32, %c0_i32_0 : i32, i32
  }
  func.func @transform_6(%arg0: i32) -> (i32, i32) {
    %c0_i32 = arith.constant 0 : i32
    %c0_i32_0 = arith.constant 0 : i32
    return %arg0, %c0_i32 : i32, i32
  }
}

</mosaic_0001>

<llo_original>
// kernel: tpu_custom_call.1
$region0: #{tpu_custom_call.1}
  #allocation0 [shape = 'u32[]', space=smem, size = 0x4, offset = 0x4, fixed_abs, tag = 'smem constant byte address 0x4 - core index']
  #allocation1 [shape = 'u32[144,128]{1,0:T(1,128)}', space=vmem, size = 0x12000, scoped, tag = 'internal scratch']
  %s0 = inlined_call_operand.hbm [shape: bf16[8,32], index: 0, kind: input, shape index: {}]
  %s1 = inlined_call_operand.hbm [shape: bf16[32,128], index: 1, kind: input, shape index: {}]
  %s2 = inlined_call_operand.hbm [shape: bf16[128,128], index: 2, kind: input, shape index: {}]
  %s3 = inlined_call_operand.hbm [shape: bf16[128,128], index: 3, kind: input, shape index: {}]
  %s4 = inlined_call_operand.hbm [shape: bf16[128,128], index: 4, kind: input, shape index: {}]
  %s5 = inlined_call_operand.vmem [shape: f32[4,128], index: 5, kind: input, shape index: {}]
  %s6 = inlined_call_operand.hbm [shape: f32[8,10], index: 6, kind: output, shape index: {}]
  %s7 = sld [smem:[#allocation0]]
  $region54: #{tpu_custom_call.1} parent=0
    _
  %s9 = ssub.s32 1, %s7
  %s10 = scalar_select 0, %s9, %s7
  $region1: #{tpu_custom_call.1} parent=0
    #allocation2 [shape = 'u8[2048]{0}', space=vmem, size = 0x800, scoped, tag = 'input window, operand 0, single buffered']
    #allocation3 [shape = 's32[1]{0}', space=sflag, size = 0x4, scoped, tag = 'scoped memory for tpu_custom_call.1']
    #allocation4 [shape = 's32[1]{0}', space=sflag, size = 0x4, scoped, tag = 'scoped memory for tpu_custom_call.1']
    #allocation5 [shape = 'u8[8192]{0}', space=vmem, size = 0x2000, scoped, tag = 'input window, operand 1, single buffered']
    #allocation6 [shape = 's32[1]{0}', space=sflag, size = 0x4, scoped, tag = 'scoped memory for tpu_custom_call.1']
    #allocation7 [shape = 'u8[32768]{0}', space=vmem, size = 0x8000, scoped, tag = 'input window, operand 2, single buffered']
    #allocation8 [shape = 'u8[32768]{0}', space=vmem, size = 0x8000, scoped, tag = 'input window, operand 3, single buffered']
    #allocation9 [shape = 's32[1]{0}', space=sflag, size = 0x4, scoped, tag = 'scoped memory for tpu_custom_call.1']
    #allocation10 [shape = 'u8[32768]{0}', space=vmem, size = 0x8000, scoped, tag = 'input window, operand 4, single buffered']
    #allocation11 [shape = 'u8[4096]{0}', space=vmem, size = 0x1000, scoped, tag = 'output window, operand 0, single buffered']
    %11 = vsyncpa [#allocation3], 0
    %12 = vsyncpa [#allocation6], 0
    %13 = vsyncpa [#allocation9], 0
    %14 = vsyncpa [#allocation4], 0
    // Predicated region
    $region2: #{tpu_custom_call.1} parent=1 // pred_check
      _
    $region3: #{tpu_custom_call.1} parent=1 // pred_check_branch
      %16 = sbr.rel (0) target = $region5
    $region4: #{tpu_custom_call.1} parent=1 // pred_region
      %s18 = ssub.s32 64, 64
      %19 = vsyncadd [#allocation3], %s18
      %s21 = sshll.u32 [#allocation2], 4
      %s22 = int_to_ptr.vmem [resolvable:$true] %s21
      %24 = dma.hbm_to_vmem [thread:$0]  %s0, 64, %s22, [#allocation3]
    $region5: #{tpu_custom_call.1} parent=1 // pred_fallthru
      _
    // Predicated region
    $region6: #{tpu_custom_call.1} parent=1 // pred_check
      _
    $region7: #{tpu_custom_call.1} parent=1 // pred_check_branch
      %26 = sbr.rel (0) target = $region9
    $region8: #{tpu_custom_call.1} parent=1 // pred_region
      %s28 = ssub.s32 256, 256
      %29 = vsyncadd [#allocation6], %s28
      %s30 = sshll.u32 [#allocation5], 4
      %s31 = int_to_ptr.vmem [resolvable:$true] %s30
      %36 = dma.hbm_to_vmem [thread:$0]  %s1, 256, %s31, [#allocation6], 64, 64, 4
    $region9: #{tpu_custom_call.1} parent=1 // pred_fallthru
      _
    // Predicated region
    $region10: #{tpu_custom_call.1} parent=1 // pred_check
      _
    $region11: #{tpu_custom_call.1} parent=1 // pred_check_branch
      %38 = sbr.rel (0) target = $region13
    $region12: #{tpu_custom_call.1} parent=1 // pred_region
      %s40 = ssub.s32 1024, 1024
      %41 = vsyncadd [#allocation6], %s40
      %s42 = sshll.u32 [#allocation7], 4
      %s43 = int_to_ptr.vmem [resolvable:$true] %s42
      %48 = dma.hbm_to_vmem [thread:$0]  %s2, 1024, %s43, [#allocation6], 64, 64, 4
    $region13: #{tpu_custom_call.1} parent=1 // pred_fallthru
      _
    // Predicated region
    $region14: #{tpu_custom_call.1} parent=1 // pred_check
      _
    $region15: #{tpu_custom_call.1} parent=1 // pred_check_branch
      %50 = sbr.rel (0) target = $region17
    $region16: #{tpu_custom_call.1} parent=1 // pred_region
      %s52 = ssub.s32 1024, 1024
      %53 = vsyncadd [#allocation9], %s52
      %s54 = sshll.u32 [#allocation8], 4
      %s55 = int_to_ptr.vmem [resolvable:$true] %s54
      %60 = dma.hbm_to_vmem [thread:$0]  %s3, 1024, %s55, [#allocation9], 64, 64, 4
    $region17: #{tpu_custom_call.1} parent=1 // pred_fallthru
      _
    // Predicated region
    $region18: #{tpu_custom_call.1} parent=1 // pred_check
      _
    $region19: #{tpu_custom_call.1} parent=1 // pred_check_branch
      %62 = sbr.rel (0) target = $region21
    $region20: #{tpu_custom_call.1} parent=1 // pred_region
      %s64 = ssub.s32 1024, 1024
      %65 = vsyncadd [#allocation9], %s64
      %s66 = sshll.u32 [#allocation10], 4
      %s67 = int_to_ptr.vmem [resolvable:$true] %s66
      %72 = dma.hbm_to_vmem [thread:$0]  %s4, 1024, %s67, [#allocation9], 64, 64, 4
    $region21: #{tpu_custom_call.1} parent=1 // pred_fallthru
      _
    // Predicated region
    $region22: #{tpu_custom_call.1} parent=1 // pred_check
      _
    $region23: #{tpu_custom_call.1} parent=1 // pred_check_branch
      %74 = sbr.rel (0) target = $region25
    $region24: #{tpu_custom_call.1} parent=1 // pred_region
      _
    $region25: #{tpu_custom_call.1} parent=1 // pred_fallthru
      _
    // Predicated region
    $region26: #{tpu_custom_call.1} parent=1 // pred_check
      _
    $region27: #{tpu_custom_call.1} parent=1 // pred_check_branch
      %76 = sbr.rel (0) target = $region29
    $region28: #{tpu_custom_call.1} parent=1 // pred_region
      %77 = dma.done [#allocation3], 64
    $region29: #{tpu_custom_call.1} parent=1 // pred_fallthru
      _
    // Predicated region
    $region30: #{tpu_custom_call.1} parent=1 // pred_check
      _
    $region31: #{tpu_custom_call.1} parent=1 // pred_check_branch
      %79 = sbr.rel (0) target = $region33
    $region32: #{tpu_custom_call.1} parent=1 // pred_region
      %80 = dma.done [#allocation6], 256
    $region33: #{tpu_custom_call.1} parent=1 // pred_fallthru
      _
    // Predicated region
    $region34: #{tpu_custom_call.1} parent=1 // pred_check
      _
    $region35: #{tpu_custom_call.1} parent=1 // pred_check_branch
      %82 = sbr.rel (0) target = $region37
    $region36: #{tpu_custom_call.1} parent=1 // pred_region
      %83 = dma.done [#allocation6], 1024
    $region37: #{tpu_custom_call.1} parent=1 // pred_fallthru
      _
    // Predicated region
    $region38: #{tpu_custom_call.1} parent=1 // pred_check
      _
    $region39: #{tpu_custom_call.1} parent=1 // pred_check_branch
      %85 = sbr.rel (0) target = $region41
    $region40: #{tpu_custom_call.1} parent=1 // pred_region
      %86 = dma.done [#allocation9], 1024
    $region41: #{tpu_custom_call.1} parent=1 // pred_fallthru
      _
    // Predicated region
    $region42: #{tpu_custom_call.1} parent=1 // pred_check
      _
    $region43: #{tpu_custom_call.1} parent=1 // pred_check_branch
      %88 = sbr.rel (0) target = $region45
    $region44: #{tpu_custom_call.1} parent=1 // pred_region
      %89 = dma.done [#allocation9], 1024
    $region45: #{tpu_custom_call.1} parent=1 // pred_fallthru
      _
    %v91 = vld [vmem:[#allocation2] sm:$0xf]
    %v92 = vld [vmem:[#allocation5] sm:$0xf]
    %v93 = vld [vmem:[#allocation5 + $0x4] sm:$0xf]
    %v94 = vld [vmem:[#allocation5 + $0x8] sm:$0xf]
    %v95 = vld [vmem:[#allocation5 + $0xc] sm:$0xf]
    %v96 = vld [vmem:[%s5] sm:$0x1]
    %v97 = vlaneseq
    %v98 = vshrl.u32 %v97, 7
    %v99 = vsub.s32 0, %v98
    %v100 = vrot.slane %v96, %v99
    %v105 = vunpack.c.l.b16 %v92
    %v106 = vunpack.c.l.b16 %v93
    %v107 = vunpack.c.l.b16 %v94
    %v108 = vunpack.c.l.b16 %v95
    %v109 = vpack.c.b16 %v106, %v105
    %v110 = vpack.c.b16 %v108, %v107
    %vm113 = vcmask 261120
    %v115 = vsel %vm113, %v91, 0
    %117 = vmatprep.subr.bf16.mxu0 0
    %118 = vmatpush1.bf16.msra.mxu0 %v109
    %119 = vmatprep.subr.bf16.mxu0 0
    %120 = vmatpush1.bf16.msra.mxu0 %v110
    %121 = vmatprep.subr.bf16.mxu0 0
    %122 = vmatpush1.bf16.msra.mxu0 0
    %123 = vmatprep.subr.bf16.mxu0 0
    %124 = vmatpush1.bf16.msra.mxu0 0
    %125 = vmatprep.subr.bf16.mxu0 0
    %126 = vmatpush1.bf16.msra.mxu0 0
    %127 = vmatprep.subr.bf16.mxu0 0
    %128 = vmatpush1.bf16.msra.mxu0 0
    %129 = vmatprep.subr.bf16.mxu0 0
    %130 = vmatpush1.bf16.msra.mxu0 0
    %131 = vmatprep.subr.bf16.mxu0 0
    %132 = vmatpush1.bf16.msra.mxu0 0
    %133 = vmatprep.subr.bf16.mxu0 0
    %134 = vmatpush1.bf16.msra.mxu0 0
    %135 = vmatprep.subr.bf16.mxu0 0
    %136 = vmatpush1.bf16.msra.mxu0 0
    %137 = vmatprep.subr.bf16.mxu0 0
    %138 = vmatpush1.bf16.msra.mxu0 0
    %139 = vmatprep.subr.bf16.mxu0 0
    %140 = vmatpush1.bf16.msra.mxu0 0
    %141 = vmatprep.subr.bf16.mxu0 0
    %142 = vmatpush1.bf16.msra.mxu0 0
    %143 = vmatprep.subr.bf16.mxu0 0
    %144 = vmatpush1.bf16.msra.mxu0 0
    %145 = vmatprep.subr.bf16.mxu0 0
    %146 = vmatpush1.bf16.msra.mxu0 0
    %147 = vmatprep.subr.bf16.mxu0 0
    %148 = vmatpush1.bf16.msra.mxu0 0
    %149 = vmatprep.mubr.bf16.mxu0 0
    %150 = vmatmul.mubr.bf16.gmra.mrb[0].mxu0 %v115
    %v151 = vpop.f32.mrb[0].mxu0
    %v152 = vadd.f32 %v100, %v151
    %v153 = vpop.f32.mrb[0].mxu0
    %v154 = vpop.f32.mrb[0].mxu0
    %v155 = vpop.f32.mrb[0].mxu0
    %156 = vdwg.mxu0
    %v157 = vmax.f32 %v152, 0.0
    %v158 = vpack.c.bf16 %v157, %v157
    %v159 = vld [vmem:[#allocation7] sm:$0xf]
    %v160 = vld [vmem:[#allocation7 + $0x4] sm:$0xf]
    %v161 = vld [vmem:[#allocation7 + $0x8] sm:$0xf]
    %v162 = vld [vmem:[#allocation7 + $0xc] sm:$0xf]
    %v163 = vld [vmem:[#allocation7 + $0x10] sm:$0xf]
    %v164 = vld [vmem:[#allocation7 + $0x14] sm:$0xf]
    %v165 = vld [vmem:[#allocation7 + $0x18] sm:$0xf]
    %v166 = vld [vmem:[#allocation7 + $0x1c] sm:$0xf]
    %v167 = vld [vmem:[#allocation7 + $0x20] sm:$0xf]
    %v168 = vld [vmem:[#allocation7 + $0x24] sm:$0xf]
    %v169 = vld [vmem:[#allocation7 + $0x28] sm:$0xf]
    %v170 = vld [vmem:[#allocation7 + $0x2c] sm:$0xf]
    %v171 = vld [vmem:[#allocation7 + $0x30] sm:$0xf]
    %v172 = vld [vmem:[#allocation7 + $0x34] sm:$0xf]
    %v173 = vld [vmem:[#allocation7 + $0x38] sm:$0xf]
    %v174 = vld [vmem:[#allocation7 + $0x3c] sm:$0xf]
    %v175 = vld [vmem:[%s5 + $0x1] sm:$0x1]
    %v176 = vlaneseq
    %v177 = vshrl.u32 %v176, 7
    %v178 = vsub.s32 0, %v177
    %v179 = vrot.slane %v175, %v178
    %v196 = vunpack.c.l.b16 %v159
    %v197 = vunpack.c.l.b16 %v160
    %v198 = vunpack.c.l.b16 %v161
    %v199 = vunpack.c.l.b16 %v162
    %v200 = vunpack.c.l.b16 %v163
    %v201 = vunpack.c.l.b16 %v164
    %v202 = vunpack.c.l.b16 %v165
    %v203 = vunpack.c.l.b16 %v166
    %v204 = vunpack.c.l.b16 %v167
    %v205 = vunpack.c.l.b16 %v168
    %v206 = vunpack.c.l.b16 %v169
    %v207 = vunpack.c.l.b16 %v170
    %v208 = vunpack.c.l.b16 %v171
    %v209 = vunpack.c.l.b16 %v172
    %v210 = vunpack.c.l.b16 %v173
    %v211 = vunpack.c.l.b16 %v174
    %v212 = vpack.c.b16 %v197, %v196
    %v213 = vpack.c.b16 %v199, %v198
    %v214 = vpack.c.b16 %v201, %v200
    %v215 = vpack.c.b16 %v203, %v202
    %v216 = vpack.c.b16 %v205, %v204
    %v217 = vpack.c.b16 %v207, %v206
    %v218 = vpack.c.b16 %v209, %v208
    %v219 = vpack.c.b16 %v211, %v210
    %228 = vmatprep.subr.bf16.mxu0 0
    %229 = vmatpush1.bf16.msra.mxu0 %v212
    %230 = vmatprep.subr.bf16.mxu0 0
    %231 = vmatpush1.bf16.msra.mxu0 %v213
    %232 = vmatprep.subr.bf16.mxu0 0
    %233 = vmatpush1.bf16.msra.mxu0 %v214
    %234 = vmatprep.subr.bf16.mxu0 0
    %235 = vmatpush1.bf16.msra.mxu0 %v215
    %236 = vmatprep.subr.bf16.mxu0 0
    %237 = vmatpush1.bf16.msra.mxu0 %v216
    %238 = vmatprep.subr.bf16.mxu0 0
    %239 = vmatpush1.bf16.msra.mxu0 %v217
    %240 = vmatprep.subr.bf16.mxu0 0
    %241 = vmatpush1.bf16.msra.mxu0 %v218
    %242 = vmatprep.subr.bf16.mxu0 0
    %243 = vmatpush1.bf16.msra.mxu0 %v219
    %244 = vmatprep.subr.bf16.mxu0 0
    %245 = vmatpush1.bf16.msra.mxu0 0
    %246 = vmatprep.subr.bf16.mxu0 0
    %247 = vmatpush1.bf16.msra.mxu0 0
    %248 = vmatprep.subr.bf16.mxu0 0
    %249 = vmatpush1.bf16.msra.mxu0 0
    %250 = vmatprep.subr.bf16.mxu0 0
    %251 = vmatpush1.bf16.msra.mxu0 0
    %252 = vmatprep.subr.bf16.mxu0 0
    %253 = vmatpush1.bf16.msra.mxu0 0
    %254 = vmatprep.subr.bf16.mxu0 0
    %255 = vmatpush1.bf16.msra.mxu0 0
    %256 = vmatprep.subr.bf16.mxu0 0
    %257 = vmatpush1.bf16.msra.mxu0 0
    %258 = vmatprep.subr.bf16.mxu0 0
    %259 = vmatpush1.bf16.msra.mxu0 0
    %260 = vmatprep.mubr.bf16.mxu0 0
    %261 = vmatmul.mubr.bf16.gmra.mrb[0].mxu0 %v158
    %v262 = vpop.f32.mrb[0].mxu0
    %v263 = vadd.f32 %v179, %v262
    %v264 = vpop.f32.mrb[0].mxu0
    %v265 = vpop.f32.mrb[0].mxu0
    %v266 = vpop.f32.mrb[0].mxu0
    %267 = vdwg.mxu0
    %v268 = vmax.f32 %v263, 0.0
    %v269 = vpack.c.bf16 %v268, %v268
    %v270 = vld [vmem:[#allocation8] sm:$0xf]
    %v271 = vld [vmem:[#allocation8 + $0x4] sm:$0xf]
    %v272 = vld [vmem:[#allocation8 + $0x8] sm:$0xf]
    %v273 = vld [vmem:[#allocation8 + $0xc] sm:$0xf]
    %v274 = vld [vmem:[#allocation8 + $0x10] sm:$0xf]
    %v275 = vld [vmem:[#allocation8 + $0x14] sm:$0xf]
    %v276 = vld [vmem:[#allocation8 + $0x18] sm:$0xf]
    %v277 = vld [vmem:[#allocation8 + $0x1c] sm:$0xf]
    %v278 = vld [vmem:[#allocation8 + $0x20] sm:$0xf]
    %v279 = vld [vmem:[#allocation8 + $0x24] sm:$0xf]
    %v280 = vld [vmem:[#allocation8 + $0x28] sm:$0xf]
    %v281 = vld [vmem:[#allocation8 + $0x2c] sm:$0xf]
    %v282 = vld [vmem:[#allocation8 + $0x30] sm:$0xf]
    %v283 = vld [vmem:[#allocation8 + $0x34] sm:$0xf]
    %v284 = vld [vmem:[#allocation8 + $0x38] sm:$0xf]
    %v285 = vld [vmem:[#allocation8 + $0x3c] sm:$0xf]
    %v286 = vld [vmem:[%s5 + $0x2] sm:$0x1]
    %v287 = vlaneseq
    %v288 = vshrl.u32 %v287, 7
    %v289 = vsub.s32 0, %v288
    %v290 = vrot.slane %v286, %v289
    %v307 = vunpack.c.l.b16 %v270
    %v308 = vunpack.c.l.b16 %v271
    %v309 = vunpack.c.l.b16 %v272
    %v310 = vunpack.c.l.b16 %v273
    %v311 = vunpack.c.l.b16 %v274
    %v312 = vunpack.c.l.b16 %v275
    %v313 = vunpack.c.l.b16 %v276
    %v314 = vunpack.c.l.b16 %v277
    %v315 = vunpack.c.l.b16 %v278
    %v316 = vunpack.c.l.b16 %v279
    %v317 = vunpack.c.l.b16 %v280
    %v318 = vunpack.c.l.b16 %v281
    %v319 = vunpack.c.l.b16 %v282
    %v320 = vunpack.c.l.b16 %v283
    %v321 = vunpack.c.l.b16 %v284
    %v322 = vunpack.c.l.b16 %v285
    %v323 = vpack.c.b16 %v308, %v307
    %v324 = vpack.c.b16 %v310, %v309
    %v325 = vpack.c.b16 %v312, %v311
    %v326 = vpack.c.b16 %v314, %v313
    %v327 = vpack.c.b16 %v316, %v315
    %v328 = vpack.c.b16 %v318, %v317
    %v329 = vpack.c.b16 %v320, %v319
    %v330 = vpack.c.b16 %v322, %v321
    %339 = vmatprep.subr.bf16.mxu0 0
    %340 = vmatpush1.bf16.msra.mxu0 %v323
    %341 = vmatprep.subr.bf16.mxu0 0
    %342 = vmatpush1.bf16.msra.mxu0 %v324
    %343 = vmatprep.subr.bf16.mxu0 0
    %344 = vmatpush1.bf16.msra.mxu0 %v325
    %345 = vmatprep.subr.bf16.mxu0 0
    %346 = vmatpush1.bf16.msra.mxu0 %v326
    %347 = vmatprep.subr.bf16.mxu0 0
    %348 = vmatpush1.bf16.msra.mxu0 %v327
    %349 = vmatprep.subr.bf16.mxu0 0
    %350 = vmatpush1.bf16.msra.mxu0 %v328
    %351 = vmatprep.subr.bf16.mxu0 0
    %352 = vmatpush1.bf16.msra.mxu0 %v329
    %353 = vmatprep.subr.bf16.mxu0 0
    %354 = vmatpush1.bf16.msra.mxu0 %v330
    %355 = vmatprep.subr.bf16.mxu0 0
    %356 = vmatpush1.bf16.msra.mxu0 0
    %357 = vmatprep.subr.bf16.mxu0 0
    %358 = vmatpush1.bf16.msra.mxu0 0
    %359 = vmatprep.subr.bf16.mxu0 0
    %360 = vmatpush1.bf16.msra.mxu0 0
    %361 = vmatprep.subr.bf16.mxu0 0
    %362 = vmatpush1.bf16.msra.mxu0 0
    %363 = vmatprep.subr.bf16.mxu0 0
    %364 = vmatpush1.bf16.msra.mxu0 0
    %365 = vmatprep.subr.bf16.mxu0 0
    %366 = vmatpush1.bf16.msra.mxu0 0
    %367 = vmatprep.subr.bf16.mxu0 0
    %368 = vmatpush1.bf16.msra.mxu0 0
    %369 = vmatprep.subr.bf16.mxu0 0
    %370 = vmatpush1.bf16.msra.mxu0 0
    %371 = vmatprep.mubr.bf16.mxu0 0
    %372 = vmatmul.mubr.bf16.gmra.mrb[0].mxu0 %v269
    %v373 = vpop.f32.mrb[0].mxu0
    %v374 = vadd.f32 %v290, %v373
    %v375 = vpop.f32.mrb[0].mxu0
    %v376 = vpop.f32.mrb[0].mxu0
    %v377 = vpop.f32.mrb[0].mxu0
    %378 = vdwg.mxu0
    %v379 = vmax.f32 %v374, 0.0
    %v380 = vpack.c.bf16 %v379, %v379
    %v381 = vld [vmem:[#allocation10] sm:$0xf]
    %v382 = vld [vmem:[#allocation10 + $0x4] sm:$0xf]
    %v383 = vld [vmem:[#allocation10 + $0x8] sm:$0xf]
    %v384 = vld [vmem:[#allocation10 + $0xc] sm:$0xf]
    %v385 = vld [vmem:[#allocation10 + $0x10] sm:$0xf]
    %v386 = vld [vmem:[#allocation10 + $0x14] sm:$0xf]
    %v387 = vld [vmem:[#allocation10 + $0x18] sm:$0xf]
    %v388 = vld [vmem:[#allocation10 + $0x1c] sm:$0xf]
    %v389 = vld [vmem:[#allocation10 + $0x20] sm:$0xf]
    %v390 = vld [vmem:[#allocation10 + $0x24] sm:$0xf]
    %v391 = vld [vmem:[#allocation10 + $0x28] sm:$0xf]
    %v392 = vld [vmem:[#allocation10 + $0x2c] sm:$0xf]
    %v393 = vld [vmem:[#allocation10 + $0x30] sm:$0xf]
    %v394 = vld [vmem:[#allocation10 + $0x34] sm:$0xf]
    %v395 = vld [vmem:[#allocation10 + $0x38] sm:$0xf]
    %v396 = vld [vmem:[#allocation10 + $0x3c] sm:$0xf]
    %v413 = vunpack.c.l.b16 %v381
    %v414 = vunpack.c.l.b16 %v382
    %v415 = vunpack.c.l.b16 %v383
    %v416 = vunpack.c.l.b16 %v384
    %v417 = vunpack.c.l.b16 %v385
    %v418 = vunpack.c.l.b16 %v386
    %v419 = vunpack.c.l.b16 %v387
    %v420 = vunpack.c.l.b16 %v388
    %v421 = vunpack.c.l.b16 %v389
    %v422 = vunpack.c.l.b16 %v390
    %v423 = vunpack.c.l.b16 %v391
    %v424 = vunpack.c.l.b16 %v392
    %v425 = vunpack.c.l.b16 %v393
    %v426 = vunpack.c.l.b16 %v394
    %v427 = vunpack.c.l.b16 %v395
    %v428 = vunpack.c.l.b16 %v396
    %v429 = vpack.c.b16 %v414, %v413
    %v430 = vpack.c.b16 %v416, %v415
    %v431 = vpack.c.b16 %v418, %v417
    %v432 = vpack.c.b16 %v420, %v419
    %v433 = vpack.c.b16 %v422, %v421
    %v434 = vpack.c.b16 %v424, %v423
    %v435 = vpack.c.b16 %v426, %v425
    %v436 = vpack.c.b16 %v428, %v427
    %445 = vmatprep.subr.bf16.mxu0 0
    %446 = vmatpush1.bf16.msra.mxu0 %v429
    %447 = vmatprep.subr.bf16.mxu0 0
    %448 = vmatpush1.bf16.msra.mxu0 %v430
    %449 = vmatprep.subr.bf16.mxu0 0
    %450 = vmatpush1.bf16.msra.mxu0 %v431
    %451 = vmatprep.subr.bf16.mxu0 0
    %452 = vmatpush1.bf16.msra.mxu0 %v432
    %453 = vmatprep.subr.bf16.mxu0 0
    %454 = vmatpush1.bf16.msra.mxu0 %v433
    %455 = vmatprep.subr.bf16.mxu0 0
    %456 = vmatpush1.bf16.msra.mxu0 %v434
    %457 = vmatprep.subr.bf16.mxu0 0
    %458 = vmatpush1.bf16.msra.mxu0 %v435
    %459 = vmatprep.subr.bf16.mxu0 0
    %460 = vmatpush1.bf16.msra.mxu0 %v436
    %461 = vmatprep.subr.bf16.mxu0 0
    %462 = vmatpush1.bf16.msra.mxu0 0
    %463 = vmatprep.subr.bf16.mxu0 0
    %464 = vmatpush1.bf16.msra.mxu0 0
    %465 = vmatprep.subr.bf16.mxu0 0
    %466 = vmatpush1.bf16.msra.mxu0 0
    %467 = vmatprep.subr.bf16.mxu0 0
    %468 = vmatpush1.bf16.msra.mxu0 0
    %469 = vmatprep.subr.bf16.mxu0 0
    %470 = vmatpush1.bf16.msra.mxu0 0
    %471 = vmatprep.subr.bf16.mxu0 0
    %472 = vmatpush1.bf16.msra.mxu0 0
    %473 = vmatprep.subr.bf16.mxu0 0
    %474 = vmatpush1.bf16.msra.mxu0 0
    %475 = vmatprep.subr.bf16.mxu0 0
    %476 = vmatpush1.bf16.msra.mxu0 0
    %477 = vmatprep.mubr.bf16.mxu0 0
    %478 = vmatmul.mubr.bf16.gmra.mrb[0].mxu0 %v380
    %v479 = vpop.f32.mrb[0].mxu0
    %v480 = vadd.f32 0.0, %v479
    %v481 = vpop.f32.mrb[0].mxu0
    %v482 = vpop.f32.mrb[0].mxu0
    %v483 = vpop.f32.mrb[0].mxu0
    %484 = vdwg.mxu0
    %v485 = vld [vmem:[%s5 + $0x3] sm:$0x1]
    %v486 = vlaneseq
    %v487 = vshrl.u32 %v486, 7
    %v488 = vsub.s32 0, %v487
    %v489 = vrot.slane %v485, %v488
    %v490 = vadd.f32 %v480, %v489
    %v491 = vmax.f32 %v490, 0.0
    %vm492 = vcmask 80896
    %493 = vst.msk [vmem:[#allocation11] sm:$0xff] %vm492, %v491
    // Predicated region
    $region46: #{tpu_custom_call.1} parent=1 // pred_check
      _
    $region47: #{tpu_custom_call.1} parent=1 // pred_check_branch
      %495 = sbr.rel (0) target = $region49
    $region48: #{tpu_custom_call.1} parent=1 // pred_region
      %s497 = ssub.s32 128, 128
      %498 = vsyncadd [#allocation4], %s497
      %s500 = sshll.u32 [#allocation11], 4
      %s501 = int_to_ptr.vmem [resolvable:$true] %s500
      %503 = dma.vmem_to_hbm [thread:$0]  %s501, 128, %s6, [#allocation4]
    $region49: #{tpu_custom_call.1} parent=1 // pred_fallthru
      _
    // Predicated region
    $region50: #{tpu_custom_call.1} parent=1 // pred_check
      _
    $region51: #{tpu_custom_call.1} parent=1 // pred_check_branch
      %505 = sbr.rel (0) target = $region53
    $region52: #{tpu_custom_call.1} parent=1 // pred_region
      %506 = dma.done [#allocation4], 128
    $region53: #{tpu_custom_call.1} parent=1 // pred_fallthru
      _
    %507 = vsyncpa [#allocation3], 1
    %508 = vsyncpa [#allocation6], 1
    %509 = vsyncpa [#allocation9], 1
    %510 = vsyncpa [#allocation4], 1

</llo_original>
